<compile_context>
chip_gen: v5e
topology: v5e:2x2
jax: 0.10.0
libtpu: 0.0.40
codegen_flags: <defaults>
</compile_context>

<pallas_src>
import functools

import jax
import jax.numpy as jnp
from jax.experimental import pallas as pl
from jax.experimental.pallas import tpu as pltpu

_LANE = 128
_SUBLANE = 8


def _round_up(x, m):
    return ((x + m - 1) // m) * m


def _large_tile_cap():
    """1024-row tiles on 128 MiB-VMEM chips (v5e/v6e); 512 on v7x (64 MiB)."""
    try:
        vmem = pltpu.get_tpu_info().vmem_capacity_bytes
    except Exception:  # conservative fallback if the query is unavailable
        vmem = 64 * 1024 * 1024
    return 1024 if vmem > 64 * 1024 * 1024 else 512


def _default_batch_tile(batch):
    """Pick a batch tile that amortizes the ~0.35us/step overhead."""
    if batch <= 16:
        # Too few rows to split usefully: one grid step.
        return _round_up(batch, _SUBLANE)
    cap = _large_tile_cap()
    if batch <= 256:
        # Two grid steps so both v7x TensorCores get work ("parallel" axis).
        return _round_up(pl.cdiv(batch, 2), _SUBLANE)
    if batch <= 2 * cap:
        # Two 128-aligned tiles; last one may be partial (handled by Pallas).
        return _round_up(pl.cdiv(batch, 2), _LANE)
    return cap


def _critic_kernel(x_ref, w1_ref, b1_ref, w2_ref, b2_ref, w3_ref, b3_ref, o_ref):
    """Fused 3-layer MLP for one batch tile.

    x_ref  : (tile, in_dim)    batch on sublanes, features on lanes
    w1_ref : (in_dim, hid)     grid-invariant weight
    w2_ref : (hid, hid)        grid-invariant weight
    b1/b2  : (1, hid)          f32 biases
    w3_ref : (1, hid)          layer-3 weight as a lane row (VPU path)
    b3_ref : (1, 1)  SMEM      scalar bias
    o_ref  : (tile, 1)         per-tile output block
    """
    x = x_ref[...]

    # Layers 1 & 2 on the MXU with f32 accumulation; bias add / ReLU in f32.
    h1 = jnp.dot(x, w1_ref[...], preferred_element_type=jnp.float32) + b1_ref[...]
    h1 = jnp.maximum(h1, 0.0)

    h2 = jnp.dot(h1.astype(w2_ref.dtype), w2_ref[...],
                 preferred_element_type=jnp.float32) + b2_ref[...]
    h2 = jnp.maximum(h2, 0.0)

    # Layer 3: a 1-output-column matmul wastes the MXU; do it as a VPU multiply
    # plus a lane (XLU) reduction instead.  b3 comes in as an SMEM scalar.
    v = jnp.sum(h2 * w3_ref[...], axis=-1, keepdims=True) + b3_ref[0, 0]  # (tile, 1)

    o_ref[...] = v.astype(o_ref.dtype)


def prepare_critic_params(w1, b1, w2, b2, w3, b3, matmul_dtype=jnp.float32):
    """One-time layout/dtype prep, hoisted out of the per-forward path.

    Only the MXU operands (W1, W2) take `matmul_dtype` (f32 or bf16 on any
    generation); biases and the layer-3 row stay f32 so accumulation / bias /
    ReLU are exact.
    """
    w1 = jnp.asarray(w1, matmul_dtype)                       # (in, hid)
    w2 = jnp.asarray(w2, matmul_dtype)                       # (hid, hid)
    b1 = jnp.asarray(b1, jnp.float32).reshape(1, -1)         # (1, hid)
    b2 = jnp.asarray(b2, jnp.float32).reshape(1, -1)         # (1, hid)
    w3 = jnp.asarray(w3, jnp.float32).reshape(1, -1)         # (1, hid) lane row
    b3 = jnp.asarray(b3, jnp.float32).reshape(1, 1)          # (1, 1) scalar
    return w1, b1, w2, b2, w3, b3


@functools.partial(jax.jit, static_argnames=("batch_tile",))
def critic_forward(state, w1, b1, w2, b2, w3_row, b3, *, batch_tile=None):
    """Forward pass.  `w1..b3` must come from `prepare_critic_params`."""
    B, input_dim = state.shape
    hidden_dim = w1.shape[1]

    if batch_tile is None:
        batch_tile = _default_batch_tile(B)
    num_tiles = pl.cdiv(B, batch_tile)

    # Only per-call cast: the activation stream matches the MXU operand dtype.
    x = state.astype(w1.dtype)

    const = lambda shape: pl.BlockSpec(shape, lambda i: (0, 0))

    out = pl.pallas_call(
        _critic_kernel,
        out_shape=jax.ShapeDtypeStruct((B, 1), jnp.float32),
        grid=(num_tiles,),
        in_specs=[
            # Partial last block: OOB rows read garbage but are row-independent
            # and their writes are dropped, so no batch padding copy is needed.
            pl.BlockSpec((batch_tile, input_dim), lambda i: (i, 0)),  # state tile
            const((input_dim, hidden_dim)),     # W1 (grid-invariant)
            const((1, hidden_dim)),             # b1
            const((hidden_dim, hidden_dim)),    # W2 (grid-invariant)
            const((1, hidden_dim)),             # b2
            const((1, hidden_dim)),             # W3 as lane row
            pl.BlockSpec(memory_space=pltpu.MemorySpace.SMEM),        # b3 scalar
        ],
        out_specs=pl.BlockSpec((batch_tile, 1), lambda i: (i, 0)),
        compiler_params=pltpu.CompilerParams(
            dimension_semantics=("parallel",),
            vmem_limit_bytes=32 * 1024 * 1024,
        ),
    )(x, w1, b1, w2, b2, w3_row, b3)

    return out


def init_critic_params(key, input_dim, hidden_dim):
    """Orthogonal init mirroring orthogonal_init() in the source."""
    k1, k2, k3 = jax.random.split(key, 3)
    ortho = jax.nn.initializers.orthogonal(scale=jnp.sqrt(2.0))
    # Stored as (in, out) so the forward pass is x @ W + b.
    w1 = ortho(k1, (input_dim, hidden_dim), jnp.float32)
    w2 = ortho(k2, (hidden_dim, hidden_dim), jnp.float32)
    w3 = ortho(k3, (hidden_dim, 1), jnp.float32)
    b1 = jnp.zeros((1, hidden_dim), jnp.float32)
    b2 = jnp.zeros((1, hidden_dim), jnp.float32)
    b3 = jnp.zeros((1, 1), jnp.float32)
    return w1, b1, w2, b2, w3, b3


def critic_reference(state, w1, b1, w2, b2, w3, b3):
    """Pure-JAX reference of the PyTorch forward pass."""
    h1 = jax.nn.relu(state @ w1 + b1)
    h2 = jax.nn.relu(h1 @ w2 + b2)
    return h2 @ w3 + b3


if __name__ == "__main__":
    key = jax.random.PRNGKey(0)
    k_state, k_params, k_big = jax.random.split(key, 3)

    batch, input_dim, hidden_dim = 8, 16, 32
    state = jax.random.normal(k_state, (batch, input_dim), jnp.float32)
    raw_params = init_critic_params(k_params, input_dim, hidden_dim)
    ref = critic_reference(state, *raw_params)

    # f32 path: exact vs. reference.
    params_f32 = prepare_critic_params(*raw_params)
    value = jax.block_until_ready(critic_forward(state, *params_f32))
    assert value.shape == (batch, 1)
    assert jnp.allclose(value, ref, atol=1e-5, rtol=1e-5), (
        f"max err {jnp.max(jnp.abs(value - ref))}"
    )

    # Ragged, multi-tile batch: exercises the cdiv grid, the partial last block
    # (no batch padding copy) and the 2-step "parallel" grid.
    big_batch = 300
    big_state = jax.random.normal(k_big, (big_batch, input_dim), jnp.float32)
    big_value = jax.block_until_ready(critic_forward(big_state, *params_f32))
    big_ref = critic_reference(big_state, *raw_params)
    assert big_value.shape == (big_batch, 1)
    assert jnp.allclose(big_value, big_ref, atol=1e-5, rtol=1e-5), (
        f"max err {jnp.max(jnp.abs(big_value - big_ref))}"
    )

    # bf16 MXU-operand path (works on v5e/v6e/v7x): f32 accumulation, looser
    # tolerance is expected precision loss, not a kernel bug.
    params_bf16 = prepare_critic_params(*raw_params, matmul_dtype=jnp.bfloat16)
    bf16_value = jax.block_until_ready(critic_forward(state, *params_bf16))
    assert bf16_value.shape == (batch, 1)
    assert jnp.allclose(bf16_value, ref, atol=1e-1, rtol=1e-1), (
        f"max err {jnp.max(jnp.abs(bf16_value - ref))}"
    )

    print("KERNEL_OK")
</pallas_src>

<mosaic_0001>
module attributes {stable_mosaic.version = 11 : i64} {
  func.func @_critic_kernel(%arg0: i32, %arg1: memref<8x16xf32, #tpu.memory_space<vmem>>, %arg2: memref<16x32xf32, #tpu.memory_space<vmem>>, %arg3: memref<1x32xf32, #tpu.memory_space<vmem>>, %arg4: memref<32x32xf32, #tpu.memory_space<vmem>>, %arg5: memref<1x32xf32, #tpu.memory_space<vmem>>, %arg6: memref<1x32xf32, #tpu.memory_space<vmem>>, %arg7: memref<1x1xf32, #tpu.memory_space<smem>>, %arg8: memref<8x1xf32, #tpu.memory_space<vmem>>) attributes {dimension_semantics = [#tpu.dimension_semantics<parallel>], iteration_bounds = array<i64: 1>, scalar_prefetch = 0 : i64, scratch_operands = 0 : i64, tpu.core_type = #tpu.core_type<tc>, window_params = [{transform_indices = @transform_0, window_bounds = array<i64: 8, 16>}, {pipeline_mode = #tpu.pipeline_mode<synchronous>, transform_indices = @transform_1, window_bounds = array<i64: 16, 32>}, {pipeline_mode = #tpu.pipeline_mode<synchronous>, transform_indices = @transform_2, window_bounds = array<i64: 1, 32>}, {pipeline_mode = #tpu.pipeline_mode<synchronous>, transform_indices = @transform_3, window_bounds = array<i64: 32, 32>}, {pipeline_mode = #tpu.pipeline_mode<synchronous>, transform_indices = @transform_4, window_bounds = array<i64: 1, 32>}, {pipeline_mode = #tpu.pipeline_mode<synchronous>, transform_indices = @transform_5, window_bounds = array<i64: 1, 32>}, {transform_indices = @transform_6, window_bounds = array<i64: 1, 1>}, {transform_indices = @transform_7, window_bounds = array<i64: 8, 1>}]} {
    %c0 = arith.constant 0 : index
    %c0_0 = arith.constant 0 : index
    %0 = vector.load %arg1[%c0, %c0_0] : memref<8x16xf32, #tpu.memory_space<vmem>>, vector<8x16xf32>
    %c0_1 = arith.constant 0 : index
    %c0_2 = arith.constant 0 : index
    %1 = vector.load %arg2[%c0_1, %c0_2] : memref<16x32xf32, #tpu.memory_space<vmem>>, vector<16x32xf32>
    %cst = arith.constant dense<0.000000e+00> : vector<8x32xf32>
    %2 = tpu.matmul %0, %1, %cst {dimension_numbers = #tpu.dot_dimension_numbers<[1], [0], [0], [1], [0, 0, 1, 1], [], []>} : vector<8x16xf32>, vector<16x32xf32>, vector<8x32xf32> -> vector<8x32xf32>
    %c0_3 = arith.constant 0 : index
    %c0_4 = arith.constant 0 : index
    %3 = vector.load %arg3[%c0_3, %c0_4] : memref<1x32xf32, #tpu.memory_space<vmem>>, vector<1x32xf32>
    %4 = vector.broadcast %3 : vector<1x32xf32> to vector<8x32xf32>
    %5 = arith.addf %2, %4 : vector<8x32xf32>
    %cst_5 = arith.constant 0.000000e+00 : f32
    %6 = vector.broadcast %cst_5 : f32 to vector<8x32xf32>
    %7 = arith.maximumf %5, %6 : vector<8x32xf32>
    %c0_6 = arith.constant 0 : index
    %c0_7 = arith.constant 0 : index
    %8 = vector.load %arg4[%c0_6, %c0_7] : memref<32x32xf32, #tpu.memory_space<vmem>>, vector<32x32xf32>
    %cst_8 = arith.constant dense<0.000000e+00> : vector<8x32xf32>
    %9 = tpu.matmul %7, %8, %cst_8 {dimension_numbers = #tpu.dot_dimension_numbers<[1], [0], [0], [1], [0, 0, 1, 1], [], []>} : vector<8x32xf32>, vector<32x32xf32>, vector<8x32xf32> -> vector<8x32xf32>
    %c0_9 = arith.constant 0 : index
    %c0_10 = arith.constant 0 : index
    %10 = vector.load %arg5[%c0_9, %c0_10] : memref<1x32xf32, #tpu.memory_space<vmem>>, vector<1x32xf32>
    %11 = vector.broadcast %10 : vector<1x32xf32> to vector<8x32xf32>
    %12 = arith.addf %9, %11 : vector<8x32xf32>
    %cst_11 = arith.constant 0.000000e+00 : f32
    %13 = vector.broadcast %cst_11 : f32 to vector<8x32xf32>
    %14 = arith.maximumf %12, %13 : vector<8x32xf32>
    %c0_12 = arith.constant 0 : index
    %c0_13 = arith.constant 0 : index
    %15 = vector.load %arg6[%c0_12, %c0_13] : memref<1x32xf32, #tpu.memory_space<vmem>>, vector<1x32xf32>
    %16 = vector.broadcast %15 : vector<1x32xf32> to vector<8x32xf32>
    %17 = arith.mulf %14, %16 : vector<8x32xf32>
    %cst_14 = arith.constant dense<0.000000e+00> : vector<8xf32>
    %18 = vector.multi_reduction <add>, %17, %cst_14 [1] : vector<8x32xf32> to vector<8xf32>
    %19 = vector.shape_cast %18 : vector<8xf32> to vector<8x1xf32>
    %c0_15 = arith.constant 0 : index
    %c0_16 = arith.constant 0 : index
    %20 = memref.load %arg7[%c0_15, %c0_16] : memref<1x1xf32, #tpu.memory_space<smem>>
    %21 = vector.broadcast %20 : f32 to vector<8x1xf32>
    %22 = arith.addf %19, %21 : vector<8x1xf32>
    %c0_17 = arith.constant 0 : index
    %c0_18 = arith.constant 0 : index
    %23 = vector.load %arg8[%c0_17, %c0_18] : memref<8x1xf32, #tpu.memory_space<vmem>>, vector<8x1xf32>
    tpu.vector_store %arg8[%c0_17, %c0_18], %22 {strides = array<i32>} : memref<8x1xf32, #tpu.memory_space<vmem>>, vector<8x1xf32>,
    return
  }
  func.func @transform_0(%arg0: i32) -> (i32, i32) {
    %c0_i32 = arith.constant 0 : i32
    %c0_i32_0 = arith.constant 0 : i32
    return %arg0, %c0_i32 : i32, i32
  }
  func.func @transform_1(%arg0: i32) -> (i32, i32) {
    %c0_i32 = arith.constant 0 : i32
    %c0_i32_0 = arith.constant 0 : i32
    %c0_i32_1 = arith.constant 0 : i32
    return %c0_i32, %c0_i32_0 : i32, i32
  }
  func.func @transform_2(%arg0: i32) -> (i32, i32) {
    %c0_i32 = arith.constant 0 : i32
    %c0_i32_0 = arith.constant 0 : i32
    %c0_i32_1 = arith.constant 0 : i32
    return %c0_i32, %c0_i32_0 : i32, i32
  }
  func.func @transform_3(%arg0: i32) -> (i32, i32) {
    %c0_i32 = arith.constant 0 : i32
    %c0_i32_0 = arith.constant 0 : i32
    %c0_i32_1 = arith.constant 0 : i32
    return %c0_i32, %c0_i32_0 : i32, i32
  }
  func.func @transform_4(%arg0: i32) -> (i32, i32) {
    %c0_i32 = arith.constant 0 : i32
    %c0_i32_0 = arith.constant 0 : i32
    %c0_i32_1 = arith.constant 0 : i32
    return %c0_i32, %c0_i32_0 : i32, i32
  }
  func.func @transform_5(%arg0: i32) -> (i32, i32) {
    %c0_i32 = arith.constant 0 : i32
    %c0_i32_0 = arith.constant 0 : i32
    %c0_i32_1 = arith.constant 0 : i32
    return %c0_i32, %c0_i32_0 : i32, i32
  }
  func.func @transform_6(%arg0: i32) -> (i32, i32) {
    %c0_i32 = arith.constant 0 : i32
    %c0_i32_0 = arith.constant 0 : i32
    %c0_i32_1 = arith.constant 0 : i32
    return %c0_i32, %c0_i32_0 : i32, i32
  }
  func.func @transform_7(%arg0: i32) -> (i32, i32) {
    %c0_i32 = arith.constant 0 : i32
    %c0_i32_0 = arith.constant 0 : i32
    return %arg0, %c0_i32 : i32, i32
  }
}

</mosaic_0001>

<llo_original>
// kernel: critic_forward.1
$region0: #{critic_forward.1}
  #allocation0 [shape = 'u32[]', space=smem, size = 0x4, offset = 0x4, fixed_abs, tag = 'smem constant byte address 0x4 - core index']
  #allocation1 [shape = 'u32[72,128]{1,0:T(1,128)}', space=vmem, size = 0x9000, scoped, tag = 'internal scratch']
  #allocation2 [shape = 'f32[1,1]{1,0:T(1,128)S(6)}', space=smem, size = 0x200, scoped, tag = 'scoped memory for critic_forward.1']
  %s0 = inlined_call_operand.hbm [shape: f32[8,16], index: 0, kind: input, shape index: {}]
  %s1 = inlined_call_operand.hbm [shape: f32[16,32], index: 1, kind: input, shape index: {}]
  %s2 = inlined_call_operand.vmem [shape: f32[1,32], index: 2, kind: input, shape index: {}]
  %s3 = inlined_call_operand.hbm [shape: f32[32,32], index: 3, kind: input, shape index: {}]
  %s4 = inlined_call_operand.vmem [shape: f32[1,32], index: 4, kind: input, shape index: {}]
  %s5 = inlined_call_operand.vmem [shape: f32[1,32], index: 5, kind: input, shape index: {}]
  %s6 = inlined_call_operand.<no memory space> [shape: f32[1,1], index: 6, kind: input, shape index: {}]
  %s7 = inlined_call_operand.vmem [shape: f32[8,1], index: 7, kind: output, shape index: {}]
  %s8 = sld [smem:[#allocation0]]
  $region50: #{critic_forward.1} parent=0
    _
  %s10 = ssub.s32 1, %s8
  %s11 = scalar_select 0, %s10, %s8
  %12 = sst [smem:[#allocation2]] %s6
  $region1: #{critic_forward.1} parent=0
    #allocation3 [shape = 'u8[4096]{0}', space=vmem, size = 0x1000, scoped, tag = 'input window, operand 0, single buffered']
    #allocation4 [shape = 's32[1]{0}', space=sflag, size = 0x4, scoped, tag = 'scoped memory for critic_forward.1']
    #allocation5 [shape = 'u8[8192]{0}', space=vmem, size = 0x2000, scoped, tag = 'input window, operand 1, single buffered']
    #allocation6 [shape = 's32[1]{0}', space=sflag, size = 0x4, scoped, tag = 'scoped memory for critic_forward.1']
    #allocation7 [shape = 'u8[16384]{0}', space=vmem, size = 0x4000, scoped, tag = 'input window, operand 3, single buffered']
    %13 = vsyncpa [#allocation4], 0
    %14 = vsyncpa [#allocation6], 0
    // Predicated region
    $region2: #{critic_forward.1} parent=1 // pred_check
      _
    $region3: #{critic_forward.1} parent=1 // pred_check_branch
      %16 = sbr.rel (0) target = $region5
    $region4: #{critic_forward.1} parent=1 // pred_region
      %18 = vsyncadd [#allocation4], 0
      %s20 = sshll.u32 %s0, 4
      %s21 = int_to_ptr.hbm [resolvable:$true] %s20
      %s22 = sshll.u32 [#allocation3], 4
      %s23 = int_to_ptr.vmem [resolvable:$true] %s22
      %25 = dma.hbm_to_vmem [thread:$0]  %s21, 128, %s23, [#allocation4]
    $region5: #{critic_forward.1} parent=1 // pred_fallthru
      _
    // Predicated region
    $region6: #{critic_forward.1} parent=1 // pred_check
      _
    $region7: #{critic_forward.1} parent=1 // pred_check_branch
      %27 = sbr.rel (0) target = $region9
    $region8: #{critic_forward.1} parent=1 // pred_region
      %29 = vsyncadd [#allocation6], 0
      %s30 = sshll.u32 %s1, 4
      %s31 = int_to_ptr.hbm [resolvable:$true] %s30
      %s32 = sshll.u32 [#allocation5], 4
      %s33 = int_to_ptr.vmem [resolvable:$true] %s32
      %38 = dma.hbm_to_vmem [thread:$0]  %s31, 256, %s33, [#allocation6], 128, 128, 8
    $region9: #{critic_forward.1} parent=1 // pred_fallthru
      _
    // Predicated region
    $region10: #{critic_forward.1} parent=1 // pred_check
      _
    $region11: #{critic_forward.1} parent=1 // pred_check_branch
      %40 = sbr.rel (0) target = $region13
    $region12: #{critic_forward.1} parent=1 // pred_region
      _
    $region13: #{critic_forward.1} parent=1 // pred_fallthru
      _
    // Predicated region
    $region14: #{critic_forward.1} parent=1 // pred_check
      _
    $region15: #{critic_forward.1} parent=1 // pred_check_branch
      %42 = sbr.rel (0) target = $region17
    $region16: #{critic_forward.1} parent=1 // pred_region
      %44 = vsyncadd [#allocation6], 0
      %s45 = sshll.u32 %s3, 4
      %s46 = int_to_ptr.hbm [resolvable:$true] %s45
      %s47 = sshll.u32 [#allocation7], 4
      %s48 = int_to_ptr.vmem [resolvable:$true] %s47
      %53 = dma.hbm_to_vmem [thread:$0]  %s46, 512, %s48, [#allocation6], 128, 128, 8
    $region17: #{critic_forward.1} parent=1 // pred_fallthru
      _
    // Predicated region
    $region18: #{critic_forward.1} parent=1 // pred_check
      _
    $region19: #{critic_forward.1} parent=1 // pred_check_branch
      %55 = sbr.rel (0) target = $region21
    $region20: #{critic_forward.1} parent=1 // pred_region
      _
    $region21: #{critic_forward.1} parent=1 // pred_fallthru
      _
    // Predicated region
    $region22: #{critic_forward.1} parent=1 // pred_check
      _
    $region23: #{critic_forward.1} parent=1 // pred_check_branch
      %57 = sbr.rel (0) target = $region25
    $region24: #{critic_forward.1} parent=1 // pred_region
      _
    $region25: #{critic_forward.1} parent=1 // pred_fallthru
      _
    // Predicated region
    $region26: #{critic_forward.1} parent=1 // pred_check
      _
    $region27: #{critic_forward.1} parent=1 // pred_check_branch
      %59 = sbr.rel (0) target = $region29
    $region28: #{critic_forward.1} parent=1 // pred_region
      _
    $region29: #{critic_forward.1} parent=1 // pred_fallthru
      _
    // Predicated region
    $region30: #{critic_forward.1} parent=1 // pred_check
      _
    $region31: #{critic_forward.1} parent=1 // pred_check_branch
      %61 = sbr.rel (0) target = $region33
    $region32: #{critic_forward.1} parent=1 // pred_region
      %63 = dma.done [#allocation4], 128
    $region33: #{critic_forward.1} parent=1 // pred_fallthru
      _
    // Predicated region
    $region34: #{critic_forward.1} parent=1 // pred_check
      _
    $region35: #{critic_forward.1} parent=1 // pred_check_branch
      %65 = sbr.rel (0) target = $region37
    $region36: #{critic_forward.1} parent=1 // pred_region
      %67 = dma.done [#allocation6], 256
    $region37: #{critic_forward.1} parent=1 // pred_fallthru
      _
    // Predicated region
    $region38: #{critic_forward.1} parent=1 // pred_check
      _
    $region39: #{critic_forward.1} parent=1 // pred_check_branch
      %69 = sbr.rel (0) target = $region41
    $region40: #{critic_forward.1} parent=1 // pred_region
      %71 = dma.done [#allocation6], 512
    $region41: #{critic_forward.1} parent=1 // pred_fallthru
      _
    %v72 = vld [vmem:[#allocation3] sm:$0xff]
    %v73 = vld [vmem:[#allocation5] sm:$0xff]
    %v74 = vld [vmem:[#allocation5 + $0x8] sm:$0xff]
    %v75 = vld [vmem:[%s2] sm:$0x1]
    %v77 = vperm.slane %v75, 0
    %vm79 = vcmask 130048
    %v81 = vsel %vm79, %v72, 0
    %83 = vmatpush.msra.mxu0 0.0
    %84 = vmatpush.msra.mxu0 0.0
    %85 = vmatpush.msra.mxu0 0.0
    %86 = vmatpush.msra.mxu0 0.0
    %87 = vmatpush.msra.mxu0 0.0
    %88 = vmatpush.msra.mxu0 0.0
    %89 = vmatpush.msra.mxu0 0.0
    %90 = vmatpush.msra.mxu0 0.0
    %91 = vmatpush.msra.mxu0 0.0
    %92 = vmatpush.msra.mxu0 0.0
    %93 = vmatpush.msra.mxu0 0.0
    %94 = vmatpush.msra.mxu0 0.0
    %95 = vmatpush.msra.mxu0 0.0
    %96 = vmatpush.msra.mxu0 0.0
    %97 = vmatpush.msra.mxu0 %v74
    %98 = vmatpush.msra.mxu0 %v73
    %99 = vmatmul.f32.gmra.mxu0 %v81
    %v100 = vpop.f32.mrf.mxu0
    %v101 = vadd.f32 %v77, %v100
    %102 = vdwg.mxu0
    %v103 = vmax.f32 %v101, 0.0
    %v104 = vld [vmem:[#allocation7] sm:$0xff]
    %v105 = vld [vmem:[#allocation7 + $0x8] sm:$0xff]
    %v106 = vld [vmem:[#allocation7 + $0x10] sm:$0xff]
    %v107 = vld [vmem:[#allocation7 + $0x18] sm:$0xff]
    %v108 = vld [vmem:[%s4] sm:$0x1]
    %v110 = vperm.slane %v108, 0
    %vm112 = vcmask 261120
    %v114 = vsel %vm112, %v103, 0
    %116 = vmatpush.msra.mxu0 0.0
    %117 = vmatpush.msra.mxu0 0.0
    %118 = vmatpush.msra.mxu0 0.0
    %119 = vmatpush.msra.mxu0 0.0
    %120 = vmatpush.msra.mxu0 0.0
    %121 = vmatpush.msra.mxu0 0.0
    %122 = vmatpush.msra.mxu0 0.0
    %123 = vmatpush.msra.mxu0 0.0
    %124 = vmatpush.msra.mxu0 0.0
    %125 = vmatpush.msra.mxu0 0.0
    %126 = vmatpush.msra.mxu0 0.0
    %127 = vmatpush.msra.mxu0 0.0
    %128 = vmatpush.msra.mxu0 %v107
    %129 = vmatpush.msra.mxu0 %v106
    %130 = vmatpush.msra.mxu0 %v105
    %131 = vmatpush.msra.mxu0 %v104
    %132 = vmatmul.f32.gmra.mxu0 %v114
    %v133 = vpop.f32.mrf.mxu0
    %v134 = vadd.f32 %v110, %v133
    %135 = vdwg.mxu0
    %v136 = vmax.f32 %v134, 0.0
    %v137 = vld [vmem:[%s5] sm:$0x1]
    %v139 = vperm.slane %v137, 0
    %v141 = vmul.f32 %v136, %v139
    %v142 = vsel %vm112, %v141, 0.0
    %143 = vadd.xlane.f32.xlu0 %v142
    %v144 = vpop.xlane.xlu0 %143
    %s145 = sld [smem:[#allocation2]]
    %v146 = vstv %s145
    %v147 = vadd.f32 %v144, %v146
    %vm148 = vcmask 7168
    %149 = vst.msk [vmem:[%s7] sm:$0xff] %vm148, %v147
    // Predicated region
    $region42: #{critic_forward.1} parent=1 // pred_check
      _
    $region43: #{critic_forward.1} parent=1 // pred_check_branch
      %151 = sbr.rel (0) target = $region45
    $region44: #{critic_forward.1} parent=1 // pred_region
      _
    $region45: #{critic_forward.1} parent=1 // pred_fallthru
      _
    // Predicated region
    $region46: #{critic_forward.1} parent=1 // pred_check
      _
    $region47: #{critic_forward.1} parent=1 // pred_check_branch
      %153 = sbr.rel (0) target = $region49
    $region48: #{critic_forward.1} parent=1 // pred_region
      _
    $region49: #{critic_forward.1} parent=1 // pred_fallthru
      _
    %154 = vsyncpa [#allocation4], 1
    %155 = vsyncpa [#allocation6], 1

</llo_original>
